<compile_context>
chip_gen: v6e
topology: v6e:2x2x1
jax: 0.10.0
libtpu: 0.0.40
codegen_flags: <defaults>
</compile_context>

<pallas_src>
import math

import jax
import jax.numpy as jnp
from jax.experimental import pallas as pl
from jax.experimental.pallas import tpu as pltpu


def _time2vec_kernel(t_ref, wbm_ref, o_ref, *scratch):
    # t_ref:   (TM, G)          -- G consecutive time scalars per packed row
    # wbm_ref: (3, G*d_model)   -- row 0: w (w0, w1..) tiled G times
    #                              row 1: b tiled G times
    #                              row 2: 1.0 where lane % d_model == 0 else 0.0
    # o_ref:   (TM, G*d_model)  -- lane-dense output tile
    # scratch: ()               when G == 1
    #          (twide_ref,)     f32 (TM, G*d_model) expansion buffer otherwise
    t = t_ref[...]                              # (TM, G)
    tm, G = t.shape
    width = wbm_ref.shape[1]
    d_model = width // G

    w = wbm_ref[0:1, :]                         # (1, width)
    b = wbm_ref[1:2, :]                         # (1, width)
    is_linear = wbm_ref[2:3, :] > 0.5           # (1, width), precomputed mask

    # Lane-expand t so each time scalar occupies d_model consecutive lanes.
    # All the heavy math below then runs on dense 128-lane vregs instead of
    # d_model-lane slices (the old per-group loop wasted ~128/d_model of the
    # VPU and issued G masked stores per output vreg).
    if G == 1:
        t_wide = jnp.broadcast_to(t[:, 0:1], (tm, width))
    else:
        twide_ref = scratch[0]
        # Static unroll: each iteration is a lane-broadcast feeding straight
        # into a store (~1 live vreg), so no spill risk despite the unroll.
        for g in range(G):
            twide_ref[:, g * d_model:(g + 1) * d_model] = jnp.broadcast_to(
                t[:, g:g + 1], (tm, d_model))
        t_wide = twide_ref[...]

    z = t_wide * w + b                          # one dense mul + add (VPU)
    v = jnp.where(is_linear, z, jnp.sin(z))     # one dense sin + one select
    o_ref[...] = v.astype(o_ref.dtype)          # single full-width store


def time2vec(t, w0, b0, w, b, *, tile_rows=8192, out_dtype=jnp.bfloat16):
    """t: (B, L); returns (B, L, d_model) with d_model = 1 + w.shape[0]."""
    B, L = t.shape
    d_model = 1 + int(w.shape[0])
    N = B * L

    # --- packing factor: make G*d_model a multiple of 128 whenever the row
    # width stays reasonable, so the output store / HBM writeback is fully
    # lane-dense for every d_model (not just divisors of 128).
    if d_model >= 128:
        G = 1
    else:
        G = math.lcm(d_model, 128) // d_model
        if G * d_model > 2048:                 # cap row width at 16 vregs
            G = max(1, 128 // d_model)
    width = G * d_model
    rows = max(1, pl.cdiv(N, G))

    out_itemsize = jnp.dtype(out_dtype).itemsize
    # Sublane quantum: 8 for 32-bit outputs, 16 for bf16/fp16 (packed vregs).
    q = 8 if out_itemsize == 4 else 16

    # --- tile size:
    #  * 24 MiB VMEM budget (headroom under the 32 MiB scoped limit requested
    #    below, which is v7x's default on its 64 MiB physical VMEM).  The
    #    (tm, G) input block lane-pads to 128 lanes in VMEM, so it costs as
    #    much per row as a 128-lane f32 output row; both streams double-buffer
    #    and the f32 expansion scratch is single-buffered.
    #  * Keep >= MIN_STEPS grid steps so ("parallel",) can shard across v7x's
    #    two TensorCores (harmless on single-TC v5e/v6e).
    in_row_bytes = pl.cdiv(G, 128) * 128 * 4
    row_bytes = 2 * (in_row_bytes + width * out_itemsize)
    if G > 1:
        row_bytes += width * 4                 # expansion scratch
    VMEM_BUDGET = 24 * 1024 * 1024
    tm_vmem = max(q, VMEM_BUDGET // row_bytes)
    MIN_STEPS = 8
    tm_split = max(q, pl.cdiv(pl.cdiv(rows, MIN_STEPS), q) * q)
    tm = min(tile_rows, rows, tm_vmem, tm_split)
    tm = max(q, (tm // q) * q)
    rows_pad = pl.cdiv(rows, tm) * tm

    # --- zero-pad the (tiny) input up to whole tiles; result is sliced back.
    t_flat = t.reshape(-1).astype(jnp.float32)
    pad = rows_pad * G - N
    if pad:
        t_flat = jnp.concatenate([t_flat, jnp.zeros((pad,), jnp.float32)])
    t_packed = t_flat.reshape(rows_pad, G)

    # --- merge weights, biases and the linear-column mask into one operand,
    # pre-tiled G times along lanes (wrapper-side, tiny and one-time).
    w_full = jnp.concatenate([w0.reshape(-1).astype(jnp.float32),
                              w.reshape(-1).astype(jnp.float32)])
    b_full = jnp.concatenate([b0.reshape(-1).astype(jnp.float32),
                              b.reshape(-1).astype(jnp.float32)])
    lin_mask = jnp.zeros((d_model,), jnp.float32).at[0].set(1.0)
    wbm = jnp.stack([jnp.tile(w_full, G),
                     jnp.tile(b_full, G),
                     jnp.tile(lin_mask, G)], axis=0)        # (3, width)

    cost = pl.CostEstimate(
        flops=3 * N * d_model,
        transcendentals=N * (d_model - 1),
        bytes_accessed=4 * N + out_itemsize * N * d_model + 3 * width * 4)

    scratch = [] if G == 1 else [pltpu.VMEM((tm, width), jnp.float32)]

    out = pl.pallas_call(
        _time2vec_kernel,
        out_shape=jax.ShapeDtypeStruct((rows_pad, width), out_dtype),
        grid_spec=pltpu.PrefetchScalarGridSpec(
            num_scalar_prefetch=0,
            grid=(rows_pad // tm,),
            in_specs=[
                pl.BlockSpec((tm, G), lambda i: (i, 0)),
                pl.BlockSpec((3, width), lambda i: (0, 0)),
            ],
            out_specs=pl.BlockSpec((tm, width), lambda i: (i, 0)),
            scratch_shapes=scratch,
        ),
        compiler_params=pltpu.CompilerParams(
            dimension_semantics=("parallel",),
            vmem_limit_bytes=32 * 1024 * 1024,
        ),
        cost_estimate=cost,
    )(t_packed, wbm)

    # Pure row-major reshape back (in-row column order is g*d_model + j).
    out = out.reshape(rows_pad * G, d_model)[:N]
    return out.reshape(B, L, d_model)


def time2vec_ref(t, w0, b0, w, b):
    """Pure-JAX reference mirroring the PyTorch forward."""
    v0 = w0 * t + b0                                   # (B, L)
    vp = jnp.sin(t[..., None] * w + b)                 # (B, L, d-1)
    return jnp.concatenate([v0[..., None], vp], axis=-1)


if __name__ == "__main__":
    key = jax.random.PRNGKey(0)

    configs = [
        # (B, L, d_model, tile_rows, out_dtype)
        (2, 8, 32, 8192, jnp.float32),      # canonical small shape
        (2, 13, 16, 8192, jnp.float32),     # B*L not divisible by packing factor G
        (2, 200, 32, 8, jnp.float32),       # multi-step grid + padded last tile
        (2, 64, 48, 8192, jnp.float32),     # d_model does not divide 128 (lcm path)
        (2, 16, 128, 8192, jnp.float32),    # G == 1 path (d_model >= 128)
        (4, 256, 32, 8192, jnp.bfloat16),   # production default: bf16 writeback
    ]
    for idx, (B, L, d_model, tile_rows, out_dtype) in enumerate(configs):
        k_t, k_w0, k_w = jax.random.split(jax.random.fold_in(key, idx), 3)

        # Deterministic parameter init (matches nn.Parameter shapes in __init__).
        w0 = jax.random.normal(k_w0, (1,), dtype=jnp.float32)            # randn(1)
        b0 = jnp.zeros((1,), dtype=jnp.float32)                          # zeros(1)
        w = jax.random.normal(k_w, (d_model - 1,), dtype=jnp.float32)    # randn(d-1)
        b = jnp.zeros((d_model - 1,), dtype=jnp.float32)                 # zeros(d-1)

        t = jax.random.uniform(k_t, (B, L), dtype=jnp.float32) * 10.0

        out = jax.block_until_ready(
            time2vec(t, w0, b0, w, b, tile_rows=tile_rows, out_dtype=out_dtype))
        ref = time2vec_ref(t, w0, b0, w, b)
        assert out.shape == (B, L, d_model), f"bad shape in config {idx}"
        if out_dtype == jnp.float32:
            assert jnp.allclose(out, ref, atol=1e-5, rtol=1e-5), f"mismatch cfg {idx}"
        else:
            assert jnp.allclose(out.astype(jnp.float32), ref,
                                atol=1e-2, rtol=1e-2), f"mismatch cfg {idx}"

    print("KERNEL_OK")
</pallas_src>

<mosaic_0001>
module attributes {stable_mosaic.version = 11 : i64} {
  func.func @_time2vec_kernel(%arg0: i32, %arg1: memref<8x4xf32, #tpu.memory_space<vmem>>, %arg2: memref<3x128xf32, #tpu.memory_space<vmem>>, %arg3: memref<8x128xf32, #tpu.memory_space<vmem>>, %arg4: memref<8x128xf32, #tpu.memory_space<vmem>>) attributes {dimension_semantics = [#tpu.dimension_semantics<parallel>], iteration_bounds = array<i64: 1>, scalar_prefetch = 0 : i64, scratch_operands = 1 : i64, tpu.core_type = #tpu.core_type<tc>, window_params = [{transform_indices = @transform_0, window_bounds = array<i64: 8, 4>}, {pipeline_mode = #tpu.pipeline_mode<synchronous>, transform_indices = @transform_1, window_bounds = array<i64: 3, 128>}, {transform_indices = @transform_2, window_bounds = array<i64: 8, 128>}]} {
    %c0 = arith.constant 0 : index
    %c0_0 = arith.constant 0 : index
    %0 = vector.load %arg1[%c0, %c0_0] : memref<8x4xf32, #tpu.memory_space<vmem>>, vector<8x4xf32>
    %c0_1 = arith.constant 0 : index
    %c0_2 = arith.constant 0 : index
    %1 = vector.load %arg2[%c0_1, %c0_2] : memref<3x128xf32, #tpu.memory_space<vmem>>, vector<1x128xf32>
    %c1 = arith.constant 1 : index
    %c0_3 = arith.constant 0 : index
    %2 = vector.load %arg2[%c1, %c0_3] : memref<3x128xf32, #tpu.memory_space<vmem>>, vector<1x128xf32>
    %c2 = arith.constant 2 : index
    %c0_4 = arith.constant 0 : index
    %3 = vector.load %arg2[%c2, %c0_4] : memref<3x128xf32, #tpu.memory_space<vmem>>, vector<1x128xf32>
    %cst = arith.constant 5.000000e-01 : f32
    %4 = vector.broadcast %cst : f32 to vector<1x128xf32>
    %5 = arith.cmpf ogt, %3, %4 : vector<1x128xf32>
    %6 = vector.extract_strided_slice %0 {offsets = [0, 0], sizes = [8, 1], strides = [1, 1]} : vector<8x4xf32> to vector<8x1xf32>
    %7 = vector.shape_cast %6 : vector<8x1xf32> to vector<8x1xf32>
    %8 = vector.broadcast %7 : vector<8x1xf32> to vector<8x32xf32>
    %c0_5 = arith.constant 0 : index
    %c0_6 = arith.constant 0 : index
    %9 = vector.load %arg4[%c0_5, %c0_6] : memref<8x128xf32, #tpu.memory_space<vmem>>, vector<8x32xf32>
    tpu.vector_store %arg4[%c0_5, %c0_6], %8 {strides = array<i32>} : memref<8x128xf32, #tpu.memory_space<vmem>>, vector<8x32xf32>,
    %10 = vector.extract_strided_slice %0 {offsets = [0, 1], sizes = [8, 1], strides = [1, 1]} : vector<8x4xf32> to vector<8x1xf32>
    %11 = vector.shape_cast %10 : vector<8x1xf32> to vector<8x1xf32>
    %12 = vector.broadcast %11 : vector<8x1xf32> to vector<8x32xf32>
    %c0_7 = arith.constant 0 : index
    %c32 = arith.constant 32 : index
    %13 = vector.load %arg4[%c0_7, %c32] : memref<8x128xf32, #tpu.memory_space<vmem>>, vector<8x32xf32>
    tpu.vector_store %arg4[%c0_7, %c32], %12 {strides = array<i32>} : memref<8x128xf32, #tpu.memory_space<vmem>>, vector<8x32xf32>,
    %14 = vector.extract_strided_slice %0 {offsets = [0, 2], sizes = [8, 1], strides = [1, 1]} : vector<8x4xf32> to vector<8x1xf32>
    %15 = vector.shape_cast %14 : vector<8x1xf32> to vector<8x1xf32>
    %16 = vector.broadcast %15 : vector<8x1xf32> to vector<8x32xf32>
    %c0_8 = arith.constant 0 : index
    %c64 = arith.constant 64 : index
    %17 = vector.load %arg4[%c0_8, %c64] : memref<8x128xf32, #tpu.memory_space<vmem>>, vector<8x32xf32>
    tpu.vector_store %arg4[%c0_8, %c64], %16 {strides = array<i32>} : memref<8x128xf32, #tpu.memory_space<vmem>>, vector<8x32xf32>,
    %18 = vector.extract_strided_slice %0 {offsets = [0, 3], sizes = [8, 1], strides = [1, 1]} : vector<8x4xf32> to vector<8x1xf32>
    %19 = vector.shape_cast %18 : vector<8x1xf32> to vector<8x1xf32>
    %20 = vector.broadcast %19 : vector<8x1xf32> to vector<8x32xf32>
    %c0_9 = arith.constant 0 : index
    %c96 = arith.constant 96 : index
    %21 = vector.load %arg4[%c0_9, %c96] : memref<8x128xf32, #tpu.memory_space<vmem>>, vector<8x32xf32>
    tpu.vector_store %arg4[%c0_9, %c96], %20 {strides = array<i32>} : memref<8x128xf32, #tpu.memory_space<vmem>>, vector<8x32xf32>,
    %c0_10 = arith.constant 0 : index
    %c0_11 = arith.constant 0 : index
    %22 = vector.load %arg4[%c0_10, %c0_11] : memref<8x128xf32, #tpu.memory_space<vmem>>, vector<8x128xf32>
    %23 = vector.broadcast %1 : vector<1x128xf32> to vector<8x128xf32>
    %24 = arith.mulf %22, %23 : vector<8x128xf32>
    %25 = vector.broadcast %2 : vector<1x128xf32> to vector<8x128xf32>
    %26 = arith.addf %24, %25 : vector<8x128xf32>
    %27 = math.sin %26 : vector<8x128xf32>
    %28 = vector.shape_cast %5 : vector<1x128xi1> to vector<1x128xi1>
    %29 = vector.broadcast %28 : vector<1x128xi1> to vector<8x128xi1>
    %30 = arith.select %29, %26, %27 : vector<8x128xi1>, vector<8x128xf32>
    %c0_12 = arith.constant 0 : index
    %c0_13 = arith.constant 0 : index
    %31 = vector.load %arg3[%c0_12, %c0_13] : memref<8x128xf32, #tpu.memory_space<vmem>>, vector<8x128xf32>
    tpu.vector_store %arg3[%c0_12, %c0_13], %30 {strides = array<i32>} : memref<8x128xf32, #tpu.memory_space<vmem>>, vector<8x128xf32>,
    return
  }
  func.func @transform_0(%arg0: i32) -> (i32, i32) {
    %c0_i32 = arith.constant 0 : i32
    %c0_i32_0 = arith.constant 0 : i32
    return %arg0, %c0_i32 : i32, i32
  }
  func.func @transform_1(%arg0: i32) -> (i32, i32) {
    %c0_i32 = arith.constant 0 : i32
    %c0_i32_0 = arith.constant 0 : i32
    %c0_i32_1 = arith.constant 0 : i32
    return %c0_i32, %c0_i32_0 : i32, i32
  }
  func.func @transform_2(%arg0: i32) -> (i32, i32) {
    %c0_i32 = arith.constant 0 : i32
    %c0_i32_0 = arith.constant 0 : i32
    return %arg0, %c0_i32 : i32, i32
  }
}

</mosaic_0001>

<llo_original>
// kernel: tpu_custom_call.1
$region0: #{tpu_custom_call.1}
  #allocation0 [shape = 'u32[]', space=smem, size = 0x4, offset = 0x4, fixed_abs, tag = 'smem constant byte address 0x4 - core index']
  #allocation1 [shape = 'u32[144,128]{1,0:T(1,128)}', space=vmem, size = 0x12000, scoped, tag = 'internal scratch']
  #allocation2 [shape = 'f32[8,128]{1,0:T(8,128)}', space=vmem, size = 0x1000, scoped, tag = 'scratch operand']
  %s0 = inlined_call_operand.vmem [shape: f32[8,4], index: 0, kind: input, shape index: {}]
  %s1 = inlined_call_operand.vmem [shape: f32[3,128], index: 1, kind: input, shape index: {}]
  %s2 = inlined_call_operand.hbm [shape: f32[8,128], index: 2, kind: output, shape index: {}]
  %s3 = sld [smem:[#allocation0]]
  $region18: #{tpu_custom_call.1} parent=0
    _
  %s5 = ssub.s32 1, %s3
  %s6 = scalar_select 0, %s5, %s3
  $region1: #{tpu_custom_call.1} parent=0
    #allocation3 [shape = 'u8[4096]{0}', space=vmem, size = 0x1000, scoped, tag = 'output window, operand 0, single buffered']
    #allocation4 [shape = 's32[1]{0}', space=sflag, size = 0x4, scoped, tag = 'scoped memory for tpu_custom_call.1']
    %7 = vsyncpa [#allocation4], 0
    // Predicated region
    $region2: #{tpu_custom_call.1} parent=1 // pred_check
      _
    $region3: #{tpu_custom_call.1} parent=1 // pred_check_branch
      %9 = sbr.rel (0) target = $region5
    $region4: #{tpu_custom_call.1} parent=1 // pred_region
      _
    $region5: #{tpu_custom_call.1} parent=1 // pred_fallthru
      _
    // Predicated region
    $region6: #{tpu_custom_call.1} parent=1 // pred_check
      _
    $region7: #{tpu_custom_call.1} parent=1 // pred_check_branch
      %11 = sbr.rel (0) target = $region9
    $region8: #{tpu_custom_call.1} parent=1 // pred_region
      _
    $region9: #{tpu_custom_call.1} parent=1 // pred_fallthru
      _
    %v12 = vld [vmem:[%s0] sm:$0xff]
    %v13 = vld [vmem:[%s1] sm:$0x1]
    %v14 = vld [vmem:[%s1 + $0x1] sm:$0x1]
    %v15 = vld [vmem:[%s1 + $0x2] sm:$0x1]
    %vm16 = vcmp.gt.f32.partialorder %v15, 0.5
    %18 = vset.pattern.permute.xlu0 0
    %19 = vperm.xlu0 %18, %v12
    %v20 = vpop.permute.xlu0 %19
    %vm22 = vcmask 261120
    %23 = vst.msk [vmem:[#allocation2] sm:$0xff] %vm22, %v20
    %24 = vset.pattern.permute.xlu0 1
    %25 = vperm.xlu0 %24, %v12
    %v26 = vpop.permute.xlu0 %25
    %vm28 = vcmask 523520
    %29 = vst.msk [vmem:[#allocation2] sm:$0xff] %vm28, %v26
    %30 = vset.pattern.permute.xlu0 2
    %31 = vperm.xlu0 %30, %v12
    %v32 = vpop.permute.xlu0 %31
    %vm34 = vcmask 785920
    %35 = vst.msk [vmem:[#allocation2] sm:$0xff] %vm34, %v32
    %36 = vset.pattern.permute.xlu0 3
    %37 = vperm.xlu0 %36, %v12
    %v38 = vpop.permute.xlu0 %37
    %vm40 = vcmask 1048320
    %41 = vst.msk [vmem:[#allocation2] sm:$0xff] %vm40, %v38
    %v42 = vld [vmem:[#allocation2] sm:$0xff]
    %v43 = vlaneseq
    %v44 = vshrl.u32 %v43, 7
    %v45 = vsub.s32 0, %v44
    %v46 = vrot.slane %v13, %v45
    %v47 = vmul.f32 %v42, %v46
    %v48 = vlaneseq
    %v49 = vshrl.u32 %v48, 7
    %v50 = vsub.s32 0, %v49
    %v51 = vrot.slane %v14, %v50
    %v52 = vadd.f32 %v47, %v51
    %v53 = vand.u32 2147483647, %v52
    %vm54 = vcmp.le.f32.partialorder %v53, 0.7853982
    %vm55 = vcmp.lt.s32.totalorder %v52, 0
    %v56 = vand.u32 %v52, 2139095040
    %v57 = vshrl.u32 %v56, 23
    %v58 = vsub.s32 %v57, 127
    %v59 = vand.u32 2147483647, %v52
    %v60 = vand.u32 %v59, 8388607
    %v61 = vor.u32 %v60, 8388608
    %v62 = vsub.s32 0, %v61
    %v63 = vadd.s32 %v58, 1
    %vm64 = vcmp.gt.s32.totalorder %v63, 0
    %v65 = vsel %vm64, %v63, 0
    %v66 = vshrl.u32 %v65, 5
    %v67 = vand.u32 %v65, 31
    %v68 = vsub.s32 32, %v67
    %v69 = vshrl.u32 683565275, %v68
    %v70 = vshll.u32 683565275, %v67
    %v71 = vshrl.u32 2475754826, %v68
    %v72 = vor.u32 %v70, %v71
    %v73 = vshll.u32 2475754826, %v67
    %v74 = vshrl.u32 2131351028, %v68
    %v75 = vor.u32 %v73, %v74
    %v76 = vshll.u32 2131351028, %v67
    %v77 = vshrl.u32 2102212464, %v68
    %v78 = vor.u32 %v76, %v77
    %v79 = vshll.u32 2102212464, %v67
    %v80 = vshrl.u32 920167782, %v68
    %v81 = vor.u32 %v79, %v80
    %v82 = vshll.u32 920167782, %v67
    %v83 = vshrl.u32 1326507024, %v68
    %v84 = vor.u32 %v82, %v83
    %vm85 = vcmp.lt.s32.totalorder %v66, 1
    %vm86 = vcmp.lt.s32.totalorder %v66, 2
    %vm87 = vcmp.lt.s32.totalorder %v66, 3
    %vm88 = vcmp.lt.s32.totalorder %v66, 4
    %v89 = vsel %vm85, %v69, %v72
    %v90 = vsel %vm88, %v78, 2102212464
    %v91 = vsel %vm87, %v75, %v90
    %v92 = vsel %vm86, %v89, %v91
    %v93 = vsel %vm85, %v72, %v75
    %v94 = vsel %vm88, %v81, 920167782
    %v95 = vsel %vm87, %v78, %v94
    %v96 = vsel %vm86, %v93, %v95
    %v97 = vsel %vm85, %v75, %v78
    %v98 = vsel %vm88, %v84, 1326507024
    %v99 = vsel %vm87, %v81, %v98
    %v100 = vsel %vm86, %v97, %v99
    %v101 = vshll.u32 %v61, 8
    %v102 = vmul.u32.u64.compose %v101, %v100
    %v103 = vextract.low.u32 %v102
    %v104 = vextract.high.u32 %v102
    %v105 = vmul.u32.u64.compose %v101, %v96
    %v106 = vextract.low.u32 %v105
    %v107 = vextract.high.u32 %v105
    %v108 = vmul.u32 %v101, %v92
    %v109 = vadd.s32 %v104, %v106
    %vm110 = vc.u32 %v104, %v106
    %v111 = vadd.s32 %v107, 1
    %v112 = vsel %vm110, %v111, %v107
    %v113 = vadd.s32 %v108, %v112
    %v114 = vadd.s32 %v113, 536870912
    %v115 = vshrl.u32 %v114, 30
    %v116 = vshll.u32 %v115, 30
    %v117 = vsub.s32 %v113, %v116
    %vm118 = vcmp.lt.s32.totalorder %v117, 0
    %v119 = vsub.s32 0, %v117
    %v120 = vsel %vm118, %v119, %v117
    %v121 = vclz %v120
    %v122 = vsub.s32 %v121, 2
    %vm123 = vcmp.gt.s32.totalorder 0, %v122
    %v124 = vsel %vm123, 0, %v122
    %v125 = vsub.s32 32, %v124
    %v126 = vshll.u32 %v117, %v124
    %v127 = vshrl.u32 %v109, %v125
    %v128 = vor.u32 %v126, %v127
    %v129 = vsub.s32 4294967266, %v124
    %v130 = vadd.s32 %v129, 127
    %v131 = vshll.u32 %v130, 23
    %v132 = vor.u32 4788187, %v131
    %v133 = vand.u32 2147483647, %v132
    %v135 = vcvt.s32.f32 %v128
    %v136 = vmul.f32 %v135, %v133
    %v137 = vxor.u32 %v136, 2147483648
    %v138 = vsel %vm55, %v137, %v136
    %v139 = vsub.s32 4, %v115
    %v140 = vsel %vm55, %v139, %v115
    %v141 = vsel %vm54, %v52, %v138
    %v142 = vsel %vm54, 0, %v140
    %v143 = vcosq.f32.pop %v141
    %v144 = vsinq.f32.pop %v141
    %vm145 = vweird.f32 %v52
    %v146 = vadd.s32 %v142, 3
    %v147 = vand.u32 %v146, 3
    %vm148 = vcmp.lt.s32.totalorder %v147, 2
    %vm149 = vcmp.eq.s32.totalorder %v147, 0
    %v150 = vxor.u32 %v144, 2147483648
    %v151 = vsel %vm149, %v143, %v150
    %vm152 = vcmp.eq.s32.totalorder %v147, 2
    %v153 = vxor.u32 %v143, 2147483648
    %v154 = vsel %vm152, %v153, %v144
    %v155 = vsel %vm148, %v151, %v154
    %v156 = vsel %vm145, nan, %v155
    %v157 = vsel %vm16, 1, 0
    %v158 = vlaneseq
    %v159 = vshrl.u32 %v158, 7
    %v160 = vsub.s32 0, %v159
    %v161 = vrot.slane %v157, %v160
    %vm162 = vcmp.eq.s32.totalorder %v161, 1
    %v163 = vsel %vm162, %v52, %v156
    %164 = vst [vmem:[#allocation3] sm:$0xff] %v163
    // Predicated region
    $region10: #{tpu_custom_call.1} parent=1 // pred_check
      _
    $region11: #{tpu_custom_call.1} parent=1 // pred_check_branch
      %166 = sbr.rel (0) target = $region13
    $region12: #{tpu_custom_call.1} parent=1 // pred_region
      %s168 = ssub.s32 128, 128
      %169 = vsyncadd [#allocation4], %s168
      %s171 = sshll.u32 [#allocation3], 4
      %s172 = int_to_ptr.vmem [resolvable:$true] %s171
      %174 = dma.vmem_to_hbm [thread:$0]  %s172, 128, %s2, [#allocation4]
    $region13: #{tpu_custom_call.1} parent=1 // pred_fallthru
      _
    // Predicated region
    $region14: #{tpu_custom_call.1} parent=1 // pred_check
      _
    $region15: #{tpu_custom_call.1} parent=1 // pred_check_branch
      %176 = sbr.rel (0) target = $region17
    $region16: #{tpu_custom_call.1} parent=1 // pred_region
      %177 = dma.done [#allocation4], 128
    $region17: #{tpu_custom_call.1} parent=1 // pred_fallthru
      _
    %178 = vsyncpa [#allocation4], 1

</llo_original>
